<compile_context>
chip_gen: v7x
topology: tpu7x:2x2x1
jax: 0.10.0
libtpu: 0.0.40
codegen_flags: <defaults>
</compile_context>

<pallas_src>
import jax
import jax.numpy as jnp
from jax.experimental import pallas as pl
from jax.experimental.pallas import tpu as pltpu


# ---------------------------------------------------------------------------
# Pallas kernel: lane-dense fused matmul + bias + ReLU
#   x_ref: (1, Cin, tP)    w_ref: (4*Cout, Cin)    b_ref: (4*Cout, 1)
#   o_ref: (1, 4*Cout, tP)
# ---------------------------------------------------------------------------
def _block_kernel(x_ref, w_ref, b_ref, o_ref):
    acc = jnp.dot(w_ref[...], x_ref[0], preferred_element_type=jnp.float32)
    acc = acc + b_ref[...]                       # (4*Cout, 1) broadcasts along lanes
    o_ref[0] = jnp.maximum(acc, 0.0).astype(o_ref.dtype)


def _pick_pixel_tile(P, max_tile=2048):
    """Largest tile that divides P and is a multiple of 128; else the full axis."""
    if P <= max_tile:
        return P
    for t in range((max_tile // 128) * 128, 127, -128):
        if P % t == 0:
            return t
    return P


def _block_matmul(x_cm, w2d, bcol, *, max_tile=2048):
    """x_cm: (N, Cin, P) channel-major, pixels on lanes.
       w2d:  (4*Cout, Cin), rows ordered (cout, di, dj).
       bcol: (4*Cout, 1).
       returns (N, 4*Cout, P)."""
    N, Cin, P = x_cm.shape
    R = w2d.shape[0]                             # 4 * Cout
    tP = _pick_pixel_tile(P, max_tile)
    grid = (N, P // tP)
    return pl.pallas_call(
        _block_kernel,
        out_shape=jax.ShapeDtypeStruct((N, R, P), x_cm.dtype),
        grid_spec=pltpu.PrefetchScalarGridSpec(
            num_scalar_prefetch=0,
            grid=grid,
            in_specs=[
                pl.BlockSpec((1, Cin, tP), lambda n, j: (n, 0, j)),
                pl.BlockSpec((R, Cin), lambda n, j: (0, 0)),   # VMEM-resident weights
                pl.BlockSpec((R, 1), lambda n, j: (0, 0)),     # VMEM-resident bias
            ],
            out_specs=pl.BlockSpec((1, R, tP), lambda n, j: (n, 0, j)),
        ),
        compiler_params=pltpu.CompilerParams(
            dimension_semantics=("parallel", "parallel"),
        ),
    )(x_cm, w2d, bcol)


# ---------------------------------------------------------------------------
# UpscaleNeck
# ---------------------------------------------------------------------------
def init_params(key, embed_dims):
    params = []
    for i in range(len(embed_dims) - 1):
        cin, cout = embed_dims[i], embed_dims[i + 1]
        key, kw, kb = jax.random.split(key, 3)
        fan = cin * 2 * 2
        bound = 1.0 / jnp.sqrt(fan)
        # PyTorch ConvTranspose2d weight layout: (Cin, Cout, kH, kW)
        w = jax.random.uniform(kw, (cin, cout, 2, 2), jnp.float32, -bound, bound)
        b = jax.random.uniform(kb, (cout,), jnp.float32, -bound, bound)
        params.append((w, b))
    return params


@jax.jit
def upscale_neck(x_nchw, params):
    """x_nchw: (N, C0, H, W) -> (N, C_K, H*2^K, W*2^K), matches PyTorch UpscaleNeck."""
    N, C0, H0, W0 = x_nchw.shape
    K = len(params)

    # channel-major, flat pixel axis (free reshape: NCHW is already channel-major)
    x = x_nchw.reshape(N, C0, H0 * W0)

    for (w, b) in params:
        cin, cout = w.shape[0], w.shape[1]
        # (Cin, Cout, 2, 2) -> rows ordered (cout, di, dj)
        w2d = jnp.transpose(w, (1, 2, 3, 0)).reshape(cout * 4, cin)
        bcol = jnp.repeat(b, 4).reshape(cout * 4, 1)
        y = _block_matmul(x, w2d, bcol)          # (N, 4*Cout, P)
        # free reinterpret as next block's channel-major input; pixel = (di, dj, old_pixel)
        x = y.reshape(N, cout, 4 * x.shape[-1])

    # Single final rearrangement to standard NCHW (one transpose over the output).
    CK = x.shape[1]
    x = x.reshape((N, CK) + (2, 2) * K + (H0, W0))
    # current trailing order: (di_K, dj_K, ..., di_1, dj_1, h0, w0)
    # target order:           (h0, di_1, ..., di_K, w0, dj_1, ..., dj_K)
    perm = ([0, 1, 2 + 2 * K]
            + [2 + 2 * (K - i) for i in range(1, K + 1)]
            + [3 + 2 * K]
            + [3 + 2 * (K - i) for i in range(1, K + 1)])
    x = jnp.transpose(x, perm)
    return x.reshape(N, CK, H0 * (2 ** K), W0 * (2 ** K))


# plain-JAX reference (same math as the PyTorch module) for a sanity check
def upscale_neck_ref(x_nchw, params):
    x = x_nchw
    for (w, b) in params:
        N, Cin, H, W = x.shape
        Cout = w.shape[1]
        # y[n, o, h, di, w, dj] = sum_c x[n,c,h,w] * w[c,o,di,dj]
        y = jnp.einsum("nchw,codb->nohdwb", x, w) + b.reshape(1, Cout, 1, 1, 1, 1)
        y = jnp.maximum(y, 0.0)
        x = y.reshape(N, Cout, 2 * H, 2 * W)
    return x


if __name__ == "__main__":
    key = jax.random.PRNGKey(0)
    embed_dims = (4, 8, 4)            # two upscale blocks: C 4 -> 8 -> 4, spatial x4
    N, H, W = 2, 16, 16

    key, kx = jax.random.split(key)
    x = jax.random.normal(kx, (N, embed_dims[0], H, W), jnp.float32)   # NCHW
    params = init_params(key, embed_dims)

    out = jax.block_until_ready(upscale_neck(x, params))

    ref = upscale_neck_ref(x, params)
    assert out.shape == (N, embed_dims[-1], 4 * H, 4 * W), out.shape
    assert jnp.allclose(out, ref, atol=1e-5, rtol=1e-5), float(jnp.max(jnp.abs(out - ref)))

    print("KERNEL_OK")
</pallas_src>

<mosaic_0001>
module attributes {stable_mosaic.version = 11 : i64} {
  func.func @_block_kernel(%arg0: i32, %arg1: i32, %arg2: memref<1x8x1024xf32, #tpu.memory_space<vmem>>, %arg3: memref<16x8xf32, #tpu.memory_space<vmem>>, %arg4: memref<16x1xf32, #tpu.memory_space<vmem>>, %arg5: memref<1x16x1024xf32, #tpu.memory_space<vmem>>) attributes {dimension_semantics = [#tpu.dimension_semantics<parallel>, #tpu.dimension_semantics<parallel>], iteration_bounds = array<i64: 2, 1>, scalar_prefetch = 0 : i64, scratch_operands = 0 : i64, tpu.core_type = #tpu.core_type<tc>, window_params = [{transform_indices = @transform_0, window_bounds = array<i64: 1, 8, 1024>}, {pipeline_mode = #tpu.pipeline_mode<synchronous>, transform_indices = @transform_1, window_bounds = array<i64: 16, 8>}, {pipeline_mode = #tpu.pipeline_mode<synchronous>, transform_indices = @transform_2, window_bounds = array<i64: 16, 1>}, {transform_indices = @transform_3, window_bounds = array<i64: 1, 16, 1024>}]} {
    %c0 = arith.constant 0 : index
    %c0_0 = arith.constant 0 : index
    %0 = vector.load %arg3[%c0, %c0_0] : memref<16x8xf32, #tpu.memory_space<vmem>>, vector<16x8xf32>
    %c0_1 = arith.constant 0 : index
    %c0_2 = arith.constant 0 : index
    %c0_3 = arith.constant 0 : index
    %1 = vector.load %arg2[%c0_1, %c0_2, %c0_3] : memref<1x8x1024xf32, #tpu.memory_space<vmem>>, vector<1x8x1024xf32>
    %2 = vector.shape_cast %1 : vector<1x8x1024xf32> to vector<8x1024xf32>
    %cst = arith.constant dense<0.000000e+00> : vector<16x1024xf32>
    %3 = tpu.matmul %0, %2, %cst {dimension_numbers = #tpu.dot_dimension_numbers<[1], [0], [0], [1], [0, 0, 1, 1], [], []>} : vector<16x8xf32>, vector<8x1024xf32>, vector<16x1024xf32> -> vector<16x1024xf32>
    %c0_4 = arith.constant 0 : index
    %c0_5 = arith.constant 0 : index
    %4 = vector.load %arg4[%c0_4, %c0_5] : memref<16x1xf32, #tpu.memory_space<vmem>>, vector<16x1xf32>
    %5 = vector.broadcast %4 : vector<16x1xf32> to vector<16x1024xf32>
    %6 = arith.addf %3, %5 : vector<16x1024xf32>
    %cst_6 = arith.constant 0.000000e+00 : f32
    %7 = vector.broadcast %cst_6 : f32 to vector<16x1024xf32>
    %8 = arith.maximumf %6, %7 : vector<16x1024xf32>
    %c0_7 = arith.constant 0 : index
    %c0_8 = arith.constant 0 : index
    %c0_9 = arith.constant 0 : index
    %9 = vector.load %arg5[%c0_7, %c0_8, %c0_9] : memref<1x16x1024xf32, #tpu.memory_space<vmem>>, vector<1x16x1024xf32>
    %10 = vector.shape_cast %9 : vector<1x16x1024xf32> to vector<16x1024xf32>
    %11 = vector.shape_cast %8 : vector<16x1024xf32> to vector<1x16x1024xf32>
    tpu.vector_store %arg5[%c0_7, %c0_8, %c0_9], %11 {strides = array<i32>} : memref<1x16x1024xf32, #tpu.memory_space<vmem>>, vector<1x16x1024xf32>,
    return
  }
  func.func @transform_0(%arg0: i32, %arg1: i32) -> (i32, i32, i32) {
    %c0_i32 = arith.constant 0 : i32
    %c0_i32_0 = arith.constant 0 : i32
    return %arg0, %c0_i32, %arg1 : i32, i32, i32
  }
  func.func @transform_1(%arg0: i32, %arg1: i32) -> (i32, i32) {
    %c0_i32 = arith.constant 0 : i32
    %c0_i32_0 = arith.constant 0 : i32
    %c0_i32_1 = arith.constant 0 : i32
    return %c0_i32, %c0_i32_0 : i32, i32
  }
  func.func @transform_2(%arg0: i32, %arg1: i32) -> (i32, i32) {
    %c0_i32 = arith.constant 0 : i32
    %c0_i32_0 = arith.constant 0 : i32
    %c0_i32_1 = arith.constant 0 : i32
    return %c0_i32, %c0_i32_0 : i32, i32
  }
  func.func @transform_3(%arg0: i32, %arg1: i32) -> (i32, i32, i32) {
    %c0_i32 = arith.constant 0 : i32
    %c0_i32_0 = arith.constant 0 : i32
    return %arg0, %c0_i32, %arg1 : i32, i32, i32
  }
}

module attributes {stable_mosaic.version = 11 : i64} {
  func.func @_block_kernel(%arg0: i32, %arg1: i32, %arg2: memref<1x4x256xf32, #tpu.memory_space<vmem>>, %arg3: memref<32x4xf32, #tpu.memory_space<vmem>>, %arg4: memref<32x1xf32, #tpu.memory_space<vmem>>, %arg5: memref<1x32x256xf32, #tpu.memory_space<vmem>>) attributes {dimension_semantics = [#tpu.dimension_semantics<parallel>, #tpu.dimension_semantics<parallel>], iteration_bounds = array<i64: 2, 1>, scalar_prefetch = 0 : i64, scratch_operands = 0 : i64, tpu.core_type = #tpu.core_type<tc>, window_params = [{transform_indices = @transform_0, window_bounds = array<i64: 1, 4, 256>}, {pipeline_mode = #tpu.pipeline_mode<synchronous>, transform_indices = @transform_1, window_bounds = array<i64: 32, 4>}, {pipeline_mode = #tpu.pipeline_mode<synchronous>, transform_indices = @transform_2, window_bounds = array<i64: 32, 1>}, {transform_indices = @transform_3, window_bounds = array<i64: 1, 32, 256>}]} {
    %c0 = arith.constant 0 : index
    %c0_0 = arith.constant 0 : index
    %0 = vector.load %arg3[%c0, %c0_0] : memref<32x4xf32, #tpu.memory_space<vmem>>, vector<32x4xf32>
    %c0_1 = arith.constant 0 : index
    %c0_2 = arith.constant 0 : index
    %c0_3 = arith.constant 0 : index
    %1 = vector.load %arg2[%c0_1, %c0_2, %c0_3] : memref<1x4x256xf32, #tpu.memory_space<vmem>>, vector<1x4x256xf32>
    %2 = vector.shape_cast %1 : vector<1x4x256xf32> to vector<4x256xf32>
    %cst = arith.constant dense<0.000000e+00> : vector<32x256xf32>
    %3 = tpu.matmul %0, %2, %cst {dimension_numbers = #tpu.dot_dimension_numbers<[1], [0], [0], [1], [0, 0, 1, 1], [], []>} : vector<32x4xf32>, vector<4x256xf32>, vector<32x256xf32> -> vector<32x256xf32>
    %c0_4 = arith.constant 0 : index
    %c0_5 = arith.constant 0 : index
    %4 = vector.load %arg4[%c0_4, %c0_5] : memref<32x1xf32, #tpu.memory_space<vmem>>, vector<32x1xf32>
    %5 = vector.broadcast %4 : vector<32x1xf32> to vector<32x256xf32>
    %6 = arith.addf %3, %5 : vector<32x256xf32>
    %cst_6 = arith.constant 0.000000e+00 : f32
    %7 = vector.broadcast %cst_6 : f32 to vector<32x256xf32>
    %8 = arith.maximumf %6, %7 : vector<32x256xf32>
    %c0_7 = arith.constant 0 : index
    %c0_8 = arith.constant 0 : index
    %c0_9 = arith.constant 0 : index
    %9 = vector.load %arg5[%c0_7, %c0_8, %c0_9] : memref<1x32x256xf32, #tpu.memory_space<vmem>>, vector<1x32x256xf32>
    %10 = vector.shape_cast %9 : vector<1x32x256xf32> to vector<32x256xf32>
    %11 = vector.shape_cast %8 : vector<32x256xf32> to vector<1x32x256xf32>
    tpu.vector_store %arg5[%c0_7, %c0_8, %c0_9], %11 {strides = array<i32>} : memref<1x32x256xf32, #tpu.memory_space<vmem>>, vector<1x32x256xf32>,
    return
  }
  func.func @transform_0(%arg0: i32, %arg1: i32) -> (i32, i32, i32) {
    %c0_i32 = arith.constant 0 : i32
    %c0_i32_0 = arith.constant 0 : i32
    return %arg0, %c0_i32, %arg1 : i32, i32, i32
  }
  func.func @transform_1(%arg0: i32, %arg1: i32) -> (i32, i32) {
    %c0_i32 = arith.constant 0 : i32
    %c0_i32_0 = arith.constant 0 : i32
    %c0_i32_1 = arith.constant 0 : i32
    return %c0_i32, %c0_i32_0 : i32, i32
  }
  func.func @transform_2(%arg0: i32, %arg1: i32) -> (i32, i32) {
    %c0_i32 = arith.constant 0 : i32
    %c0_i32_0 = arith.constant 0 : i32
    %c0_i32_1 = arith.constant 0 : i32
    return %c0_i32, %c0_i32_0 : i32, i32
  }
  func.func @transform_3(%arg0: i32, %arg1: i32) -> (i32, i32, i32) {
    %c0_i32 = arith.constant 0 : i32
    %c0_i32_0 = arith.constant 0 : i32
    return %arg0, %c0_i32, %arg1 : i32, i32, i32
  }
}

</mosaic_0001>

<llo_original>
// kernel: upscale_neck.3
$region0: #{upscale_neck.3}
  #allocation0 [shape = 'u32[]', space=smem, size = 0x4, offset = 0x4, fixed_abs, tag = 'smem constant byte address 0x4 - core index']
  #allocation1 [shape = 'u32[144,128]{1,0:T(1,128)}', space=vmem, size = 0x12000, scoped, tag = 'internal scratch']
  %s0 = inlined_call_operand.vmem [shape: f32[2,8,1024], index: 0, kind: input, shape index: {}]
  %s1 = inlined_call_operand.hbm [shape: f32[16,8], index: 1, kind: input, shape index: {}]
  %s2 = inlined_call_operand.vmem [shape: f32[16,1], index: 2, kind: input, shape index: {}]
  %s3 = inlined_call_operand.vmem [shape: f32[2,16,1024], index: 3, kind: output, shape index: {}]
  %s4 = sld [smem:[#allocation0]]
  $region49: #{upscale_neck.3} parent=0
    _
  %s6 = ssub.s32 1, %s4
  %s7 = scalar_select 0, %s6, %s4
  $region1: #{upscale_neck.3} parent=0
    #allocation2 [shape = 'u8[8192]{0}', space=vmem, size = 0x2000, scoped, tag = 'input window, operand 1, single buffered']
    #allocation3 [shape = 's32[2]{0}', space=sflag, size = 0x8, scoped, tag = 'scoped memory for upscale_neck.3']
    %8 = vsyncpa [#allocation3], 0
    loop: start=0, step=1, limit=4
    $region2: #{upscale_neck.3} parent=1 // loop_pre_header
      _
    $region3: #{upscale_neck.3} parent=1 // loop_header
      %s10 = sphi 0, %s14
      %p11 = scmp.ge.s32.totalorder %s10, 4
      %s17 = sphi 0, %s29
      %s18 = sphi 0, %s25
      %s19 = sphi 0, %s17
      %s20 = sphi 0, %s18
      %s21 = sphi 0, %s19
      %s22 = sphi 0, %s20
      %s34 = sphi 0, %s36
      %s37 = sphi 0, %s34
      %s38 = sphi 0, %s37
      %s54 = sphi 0, %s38
      %s58 = sphi 0, %s58
      %s60 = sphi 0, %s58
      %s61 = sphi 0, %s60
      %s75 = sphi 0, %s61
      %s79 = sphi 0, %s79
      %s81 = sphi 0, %s79
      %s82 = sphi 0, %s81
      %s96 = sphi 0, %s82
      %s104 = sphi 0, %s106
      %s107 = sphi 0, %s104
      %s108 = sphi 0, %s107
      %s124 = sphi 0, %s108
    $region4: #{upscale_neck.3} parent=1 // loop_header_branch
      %13 = sbr.rel (%p11) target = $region8
    $region5: #{upscale_neck.3} parent=1 // loop_body
      %s15 = ssub.s32 %s10, 1
      %s16 = ssub.s32 %s10, 2
      %s23 = sadd.s32 1, %s18
      %p24 = scmp.ge.s32.totalorder %s23, 1
      %s25 = scalar_select %p24, 0, %s23
      %s26 = sadd.s32 1, %s17
      %s27 = scalar_select %p24, %s26, %s17
      %p28 = scmp.ge.s32.totalorder %s27, 2
      %s29 = scalar_select %p28, 0, %s27
      %s30 = ssub.s32 %s17, %s29
      %s31 = ssub.s32 %s18, %s25
      %s32 = sor.u32 %s30, %s31
      %p33 = scmp.eq.s32.totalorder %s32, 0
      %s35 = sadd.s32 %s34, 1
      %s36 = scalar_select %p33, %s34, %s35
      %p39 = pneg %p33
      %p40 = scmp.eq.s32.totalorder %s10, 1
      %p41 = por %p39, %p40
      %p42 = scmp.ne.s32.totalorder %s34, %s37
      %p43 = scmp.eq.s32.totalorder %s10, 0
      %p44 = por %p42, %p43
      %p45 = scmp.ne.s32.totalorder %s34, %s37
      %p46 = scmp.eq.s32.totalorder %s15, 1
      %p47 = por %p45, %p46
      %p48 = scmp.ne.s32.totalorder %s37, %s38
      %p49 = scmp.eq.s32.totalorder %s15, 0
      %p50 = por %p48, %p49
      %p51 = scmp.ne.s32.totalorder %s37, %s38
      %p52 = scmp.eq.s32.totalorder %s16, 1
      %p53 = por %p51, %p52
      %p55 = scmp.ne.s32.totalorder %s38, %s54
      %p56 = scmp.eq.s32.totalorder %s16, 0
      %p57 = por %p55, %p56
      %s59 = sadd.s32 %s58, 1
      %p62 = scmp.eq.s32.totalorder %s10, 1
      %p63 = scmp.ne.s32.totalorder %s58, %s60
      %p64 = scmp.eq.s32.totalorder %s10, 0
      %p65 = por %p63, %p64
      %p66 = scmp.ne.s32.totalorder %s58, %s60
      %p67 = scmp.eq.s32.totalorder %s15, 1
      %p68 = por %p66, %p67
      %p69 = scmp.ne.s32.totalorder %s60, %s61
      %p70 = scmp.eq.s32.totalorder %s15, 0
      %p71 = por %p69, %p70
      %p72 = scmp.ne.s32.totalorder %s60, %s61
      %p73 = scmp.eq.s32.totalorder %s16, 1
      %p74 = por %p72, %p73
      %p76 = scmp.ne.s32.totalorder %s61, %s75
      %p77 = scmp.eq.s32.totalorder %s16, 0
      %p78 = por %p76, %p77
      %s80 = sadd.s32 %s79, 1
      %p83 = scmp.eq.s32.totalorder %s10, 1
      %p84 = scmp.ne.s32.totalorder %s79, %s81
      %p85 = scmp.eq.s32.totalorder %s10, 0
      %p86 = por %p84, %p85
      %p87 = scmp.ne.s32.totalorder %s79, %s81
      %p88 = scmp.eq.s32.totalorder %s15, 1
      %p89 = por %p87, %p88
      %p90 = scmp.ne.s32.totalorder %s81, %s82
      %p91 = scmp.eq.s32.totalorder %s15, 0
      %p92 = por %p90, %p91
      %p93 = scmp.ne.s32.totalorder %s81, %s82
      %p94 = scmp.eq.s32.totalorder %s16, 1
      %p95 = por %p93, %p94
      %p97 = scmp.ne.s32.totalorder %s82, %s96
      %p98 = scmp.eq.s32.totalorder %s16, 0
      %p99 = por %p97, %p98
      %s100 = ssub.s32 %s17, %s29
      %s101 = ssub.s32 %s18, %s25
      %s102 = sor.u32 %s100, %s101
      %p103 = scmp.eq.s32.totalorder %s102, 0
      %s105 = sadd.s32 %s104, 1
      %s106 = scalar_select %p103, %s104, %s105
      %p109 = pneg %p103
      %p110 = scmp.eq.s32.totalorder %s10, 1
      %p111 = por %p109, %p110
      %p112 = scmp.ne.s32.totalorder %s104, %s107
      %p113 = scmp.eq.s32.totalorder %s10, 0
      %p114 = por %p112, %p113
      %p115 = scmp.ne.s32.totalorder %s104, %s107
      %p116 = scmp.eq.s32.totalorder %s15, 1
      %p117 = por %p115, %p116
      %p118 = scmp.ne.s32.totalorder %s107, %s108
      %p119 = scmp.eq.s32.totalorder %s15, 0
      %p120 = por %p118, %p119
      %p121 = scmp.ne.s32.totalorder %s107, %s108
      %p122 = scmp.eq.s32.totalorder %s16, 1
      %p123 = por %p121, %p122
      %p125 = scmp.ne.s32.totalorder %s108, %s124
      %p126 = scmp.eq.s32.totalorder %s16, 0
      %p127 = por %p125, %p126
      %p128 = scmp.le.s32.totalorder 1, %s10
      %p129 = scmp.lt.s32.totalorder %s10, 3
      %p130 = pnand %p128, %p129
      %p131 = pneg %p130
      // Predicated region
      $region9: #{upscale_neck.3} parent=5 // pred_check
        _
      $region10: #{upscale_neck.3} parent=5 // pred_check_branch
        %133 = sbr.rel (%p130) target = $region12
      $region11: #{upscale_neck.3} parent=5 // pred_region
        %s134 = ssub.s32 %s10, 1
        // Predicated region
        $region13: #{upscale_neck.3} parent=11 // pred_check
          %p135 = pneg %p71
        $region14: #{upscale_neck.3} parent=11 // pred_check_branch
          %137 = sbr.rel (%p135) target = $region16
        $region15: #{upscale_neck.3} parent=11 // pred_region
          %s139 = ssub.s32 256, 256
          %140 = vsyncadd [#allocation3], %s139
          %s141 = sshll.u32 [#allocation2], 4
          %s142 = int_to_ptr.vmem [resolvable:$true] %s141
          %147 = dma.hbm_to_vmem [thread:$0]  %s1, 256, %s142, [#allocation3], 128, 128, 8
        $region16: #{upscale_neck.3} parent=11 // pred_fallthru
          _
        // Predicated region
        $region17: #{upscale_neck.3} parent=11 // pred_check
          %p148 = pneg %p92
        $region18: #{upscale_neck.3} parent=11 // pred_check_branch
          %150 = sbr.rel (%p148) target = $region20
        $region19: #{upscale_neck.3} parent=11 // pred_region
          _
        $region20: #{upscale_neck.3} parent=11 // pred_fallthru
          _
      $region12: #{upscale_neck.3} parent=5 // pred_fallthru
        _
      %p151 = scmp.lt.s32.totalorder %s10, 2
      // Predicated region
      $region21: #{upscale_neck.3} parent=5 // pred_check
        %p152 = pneg %p151
      $region22: #{upscale_neck.3} parent=5 // pred_check_branch
        %154 = sbr.rel (%p152) target = $region24
      $region23: #{upscale_neck.3} parent=5 // pred_region
        // Predicated region
        $region25: #{upscale_neck.3} parent=23 // pred_check
          %p155 = pneg %p44
        $region26: #{upscale_neck.3} parent=23 // pred_check_branch
          %157 = sbr.rel (%p155) target = $region28
        $region27: #{upscale_neck.3} parent=23 // pred_region
          %s158 = smul.u32 8, %s18
          %p159 = scmp.lt.s32.totalorder %s17, 1
          %s160 = scalar_select %p159, %s17, 1
          %p161 = scmp.lt.s32.totalorder %s158, 7
          %s162 = scalar_select %p161, %s158, 7
          %s163 = smul.addr %s160, 8
          %s164 = sadd.s32 %s162, %s163
          %s165 = smul.addr %s164, 8
          %s166 = scalar_lea.vmem %s0, %s165
          %s167 = smul.u32 8, %s18
        $region28: #{upscale_neck.3} parent=23 // pred_fallthru
          _
      $region24: #{upscale_neck.3} parent=5 // pred_fallthru
        _
      %p168 = scmp.le.s32.totalorder 1, %s10
      %p169 = scmp.lt.s32.totalorder %s10, 3
      %p170 = pnand %p168, %p169
      %p171 = pneg %p170
      // Predicated region
      $region29: #{upscale_neck.3} parent=5 // pred_check
        _
      $region30: #{upscale_neck.3} parent=5 // pred_check_branch
        %173 = sbr.rel (%p170) target = $region32
      $region31: #{upscale_neck.3} parent=5 // pred_region
        %s174 = ssub.s32 %s10, 1
        // Predicated region
        $region33: #{upscale_neck.3} parent=31 // pred_check
          %p175 = pneg %p71
        $region34: #{upscale_neck.3} parent=31 // pred_check_branch
          %177 = sbr.rel (%p175) target = $region36
        $region35: #{upscale_neck.3} parent=31 // pred_region
          %178 = dma.done [#allocation3], 256
        $region36: #{upscale_neck.3} parent=31 // pred_fallthru
          _
        %s179 = smul.u32 8, %s20
        %p180 = scmp.lt.s32.totalorder %s19, 1
        %s181 = scalar_select %p180, %s19, 1
        %p182 = scmp.lt.s32.totalorder %s179, 7
        %s183 = scalar_select %p182, %s179, 7
        %s184 = smul.addr %s181, 8
        %s185 = sadd.s32 %s183, %s184
        %s186 = smul.addr %s185, 8
        %s187 = scalar_lea.vmem %s0, %s186
        %p188 = pneg %p50
        %p189 = pneg %p47
        %p190 = pneg %p71
        %p191 = pneg %p68
        %p192 = pneg %p92
        %p193 = pneg %p89
        %p194 = pneg %p120
        %p195 = pneg %p117
        %s196 = smul.u32 8, %s20
        %p197 = scmp.lt.s32.totalorder %s19, 1
        %s198 = scalar_select %p197, %s19, 1
        %p199 = scmp.lt.s32.totalorder %s196, 7
        %s200 = scalar_select %p199, %s196, 7
        %s201 = smul.addr %s198, 16
        %s202 = sadd.s32 %s200, %s201
        %s203 = smul.addr %s202, 8
        %s204 = scalar_lea.vmem %s3, %s203
        %s205 = smul.u32 8, %s20
        %p206 = scmp.lt.s32.totalorder %s19, 1
        %s207 = scalar_select %p206, %s19, 1
        %p208 = scmp.lt.s32.totalorder %s205, 7
        %s209 = scalar_select %p208, %s205, 7
        %s210 = smul.addr %s207, 8
        %s211 = sadd.s32 %s209, %s210
        %s212 = smul.addr %s211, 8
        %s213 = scalar_lea.vmem %s0, %s212
        %s214 = smul.u32 8, %s20
        %s215 = smul.u32 8, %s20
        %p216 = scmp.lt.s32.totalorder %s19, 1
        %s217 = scalar_select %p216, %s19, 1
        %p218 = scmp.lt.s32.totalorder %s215, 7
        %s219 = scalar_select %p218, %s215, 7
        %s220 = smul.addr %s217, 16
        %s221 = sadd.s32 %s219, %s220
        %s222 = smul.addr %s221, 8
        %s223 = scalar_lea.vmem %s3, %s222
        %s224 = smul.u32 8, %s20
        %v225 = vld [vmem:[#allocation2] sm:$0xff]
        %v226 = vld [vmem:[#allocation2 + $0x8] sm:$0xff]
        %v227 = vld [vmem:[%s213] sm:$0xff]
        %v228 = vld [vmem:[%s213 + $0x8] sm:$0xff]
        %v229 = vld [vmem:[%s213 + $0x10] sm:$0xff]
        %v230 = vld [vmem:[%s213 + $0x18] sm:$0xff]
        %v231 = vld [vmem:[%s213 + $0x20] sm:$0xff]
        %v232 = vld [vmem:[%s213 + $0x28] sm:$0xff]
        %v233 = vld [vmem:[%s213 + $0x30] sm:$0xff]
        %v234 = vld [vmem:[%s213 + $0x38] sm:$0xff]
        %v235 = vld [vmem:[%s2] sm:$0xff]
        %v236 = vld [vmem:[%s2 + $0x8] sm:$0xff]
        %238 = vset.pattern.permute.xlu0 0
        %239 = vperm.xlu0 %238, %v235
        %v240 = vpop.permute.xlu0 %239
        %243 = vset.pattern.permute.xlu0 0
        %244 = vperm.xlu0 %243, %v236
        %v245 = vpop.permute.xlu0 %244
        %vm247 = vcmask 64512
        %v249 = vsel %vm247, %v225, 0
        %v252 = vsel %vm247, %v226, 0
        %254 = vmatprep.subr.mxu0 %v228
        %255 = vmatpush1.msra.mxu0 %v227
        %256 = vmatprep.subr.mxu0 0.0
        %257 = vmatpush1.msra.mxu0 0.0
        %258 = vmatprep.subr.mxu0 0.0
        %259 = vmatpush1.msra.mxu0 0.0
        %260 = vmatprep.subr.mxu0 0.0
        %261 = vmatpush1.msra.mxu0 0.0
        %262 = vmatprep.subr.mxu0 0.0
        %263 = vmatpush1.msra.mxu0 0.0
        %264 = vmatprep.subr.mxu0 0.0
        %265 = vmatpush1.msra.mxu0 0.0
        %266 = vmatprep.subr.mxu0 0.0
        %267 = vmatpush1.msra.mxu0 0.0
        %268 = vmatprep.subr.mxu0 0.0
        %269 = vmatpush1.msra.mxu0 0.0
        %270 = vmatprep.subr.mxu0 0.0
        %271 = vmatpush1.msra.mxu0 0.0
        %272 = vmatprep.subr.mxu0 0.0
        %273 = vmatpush1.msra.mxu0 0.0
        %274 = vmatprep.subr.mxu0 0.0
        %275 = vmatpush1.msra.mxu0 0.0
        %276 = vmatprep.subr.mxu0 0.0
        %277 = vmatpush1.msra.mxu0 0.0
        %278 = vmatprep.subr.mxu0 0.0
        %279 = vmatpush1.msra.mxu0 0.0
        %280 = vmatprep.subr.mxu0 0.0
        %281 = vmatpush1.msra.mxu0 0.0
        %282 = vmatprep.subr.mxu0 0.0
        %283 = vmatpush1.msra.mxu0 0.0
        %284 = vmatprep.subr.mxu0 0.0
        %285 = vmatpush1.msra.mxu0 0.0
        %286 = vmatprep.subr.mxu0 0.0
        %287 = vmatpush1.msra.mxu0 0.0
        %288 = vmatprep.subr.mxu0 0.0
        %289 = vmatpush1.msra.mxu0 0.0
        %290 = vmatprep.subr.mxu0 0.0
        %291 = vmatpush1.msra.mxu0 0.0
        %292 = vmatprep.subr.mxu0 0.0
        %293 = vmatpush1.msra.mxu0 0.0
        %294 = vmatprep.subr.mxu0 0.0
        %295 = vmatpush1.msra.mxu0 0.0
        %296 = vmatprep.subr.mxu0 0.0
        %297 = vmatpush1.msra.mxu0 0.0
        %298 = vmatprep.subr.mxu0 0.0
        %299 = vmatpush1.msra.mxu0 0.0
        %300 = vmatprep.subr.mxu0 0.0
        %301 = vmatpush1.msra.mxu0 0.0
        %302 = vmatprep.subr.mxu0 0.0
        %303 = vmatpush1.msra.mxu0 0.0
        %304 = vmatprep.subr.mxu0 0.0
        %305 = vmatpush1.msra.mxu0 0.0
        %306 = vmatprep.subr.mxu0 0.0
        %307 = vmatpush1.msra.mxu0 0.0
        %308 = vmatprep.subr.mxu0 0.0
        %309 = vmatpush1.msra.mxu0 0.0
        %310 = vmatprep.subr.mxu0 0.0
        %311 = vmatpush1.msra.mxu0 0.0
        %312 = vmatprep.subr.mxu0 0.0
        %313 = vmatpush1.msra.mxu0 0.0
        %314 = vmatprep.subr.mxu0 0.0
        %315 = vmatpush1.msra.mxu0 0.0
        %316 = vmatprep.subr.mxu0 0.0
        %317 = vmatpush1.msra.mxu0 0.0
        %318 = vmatprep.mubr.f32.mxu0 0.0
        %319 = vmatmul.mubr.f32.gmra.mrb[0].mxu0 %v249
        %v320 = vpop.f32.mrb[0].mxu0
        %v321 = vadd.f32 %v240, %v320
        %v322 = vpop.f32.mrb[0].mxu0
        %v323 = vadd.f32 %v240, %v322
        %324 = vmatprep.mubr.f32.mxu0 0.0
        %325 = vmatmul.mubr.f32.gmra.mrb[0].mxu0 %v252
        %v326 = vpop.f32.mrb[0].mxu0
        %v327 = vadd.f32 %v245, %v326
        %v328 = vpop.f32.mrb[0].mxu0
        %v329 = vadd.f32 %v245, %v328
        %330 = vdwg.mxu0
        %331 = vmatprep.subr.mxu0 %v230
        %332 = vmatpush1.msra.mxu0 %v229
        %333 = vmatprep.subr.mxu0 0.0
        %334 = vmatpush1.msra.mxu0 0.0
        %335 = vmatprep.subr.mxu0 0.0
        %336 = vmatpush1.msra.mxu0 0.0
        %337 = vmatprep.subr.mxu0 0.0
        %338 = vmatpush1.msra.mxu0 0.0
        %339 = vmatprep.subr.mxu0 0.0
        %340 = vmatpush1.msra.mxu0 0.0
        %341 = vmatprep.subr.mxu0 0.0
        %342 = vmatpush1.msra.mxu0 0.0
        %343 = vmatprep.subr.mxu0 0.0
        %344 = vmatpush1.msra.mxu0 0.0
        %345 = vmatprep.subr.mxu0 0.0
        %346 = vmatpush1.msra.mxu0 0.0
        %347 = vmatprep.subr.mxu0 0.0
        %348 = vmatpush1.msra.mxu0 0.0
        %349 = vmatprep.subr.mxu0 0.0
        %350 = vmatpush1.msra.mxu0 0.0
        %351 = vmatprep.subr.mxu0 0.0
        %352 = vmatpush1.msra.mxu0 0.0
        %353 = vmatprep.subr.mxu0 0.0
        %354 = vmatpush1.msra.mxu0 0.0
        %355 = vmatprep.subr.mxu0 0.0
        %356 = vmatpush1.msra.mxu0 0.0
        %357 = vmatprep.subr.mxu0 0.0
        %358 = vmatpush1.msra.mxu0 0.0
        %359 = vmatprep.subr.mxu0 0.0
        %360 = vmatpush1.msra.mxu0 0.0
        %361 = vmatprep.subr.mxu0 0.0
        %362 = vmatpush1.msra.mxu0 0.0
        %363 = vmatprep.subr.mxu0 0.0
        %364 = vmatpush1.msra.mxu0 0.0
        %365 = vmatprep.subr.mxu0 0.0
        %366 = vmatpush1.msra.mxu0 0.0
        %367 = vmatprep.subr.mxu0 0.0
        %368 = vmatpush1.msra.mxu0 0.0
        %369 = vmatprep.subr.mxu0 0.0
        %370 = vmatpush1.msra.mxu0 0.0
        %371 = vmatprep.subr.mxu0 0.0
        %372 = vmatpush1.msra.mxu0 0.0
        %373 = vmatprep.subr.mxu0 0.0
        %374 = vmatpush1.msra.mxu0 0.0
        %375 = vmatprep.subr.mxu0 0.0
        %376 = vmatpush1.msra.mxu0 0.0
        %377 = vmatprep.subr.mxu0 0.0
        %378 = vmatpush1.msra.mxu0 0.0
        %379 = vmatprep.subr.mxu0 0.0
        %380 = vmatpush1.msra.mxu0 0.0
        %381 = vmatprep.subr.mxu0 0.0
        %382 = vmatpush1.msra.mxu0 0.0
        %383 = vmatprep.subr.mxu0 0.0
        %384 = vmatpush1.msra.mxu0 0.0
        %385 = vmatprep.subr.mxu0 0.0
        %386 = vmatpush1.msra.mxu0 0.0
        %387 = vmatprep.subr.mxu0 0.0
        %388 = vmatpush1.msra.mxu0 0.0
        %389 = vmatprep.subr.mxu0 0.0
        %390 = vmatpush1.msra.mxu0 0.0
        %391 = vmatprep.subr.mxu0 0.0
        %392 = vmatpush1.msra.mxu0 0.0
        %393 = vmatprep.subr.mxu0 0.0
        %394 = vmatpush1.msra.mxu0 0.0
        %395 = vmatprep.mubr.f32.mxu0 0.0
        %396 = vmatmul.mubr.f32.gmra.mrb[0].mxu0 %v249
        %v397 = vpop.f32.mrb[0].mxu0
        %v398 = vadd.f32 %v240, %v397
        %v399 = vpop.f32.mrb[0].mxu0
        %v400 = vadd.f32 %v240, %v399
        %401 = vmatprep.mubr.f32.mxu0 0.0
        %402 = vmatmul.mubr.f32.gmra.mrb[0].mxu0 %v252
        %v403 = vpop.f32.mrb[0].mxu0
        %v404 = vadd.f32 %v245, %v403
        %v405 = vpop.f32.mrb[0].mxu0
        %v406 = vadd.f32 %v245, %v405
        %407 = vdwg.mxu0
        %408 = vmatprep.subr.mxu0 %v232
        %409 = vmatpush1.msra.mxu0 %v231
        %410 = vmatprep.subr.mxu0 0.0
        %411 = vmatpush1.msra.mxu0 0.0
        %412 = vmatprep.subr.mxu0 0.0
        %413 = vmatpush1.msra.mxu0 0.0
        %414 = vmatprep.subr.mxu0 0.0
        %415 = vmatpush1.msra.mxu0 0.0
        %416 = vmatprep.subr.mxu0 0.0
        %417 = vmatpush1.msra.mxu0 0.0
        %418 = vmatprep.subr.mxu0 0.0
        %419 = vmatpush1.msra.mxu0 0.0
        %420 = vmatprep.subr.mxu0 0.0
        %421 = vmatpush1.msra.mxu0 0.0
        %422 = vmatprep.subr.mxu0 0.0
        %423 = vmatpush1.msra.mxu0 0.0
        %424 = vmatprep.subr.mxu0 0.0
        %425 = vmatpush1.msra.mxu0 0.0
        %426 = vmatprep.subr.mxu0 0.0
        %427 = vmatpush1.msra.mxu0 0.0
        %428 = vmatprep.subr.mxu0 0.0
        %429 = vmatpush1.msra.mxu0 0.0
        %430 = vmatprep.subr.mxu0 0.0
        %431 = vmatpush1.msra.mxu0 0.0
        %432 = vmatprep.subr.mxu0 0.0
        %433 = vmatpush1.msra.mxu0 0.0
        %434 = vmatprep.subr.mxu0 0.0
        %435 = vmatpush1.msra.mxu0 0.0
        %436 = vmatprep.subr.mxu0 0.0
        %437 = vmatpush1.msra.mxu0 0.0
        %438 = vmatprep.subr.mxu0 0.0
        %439 = vmatpush1.msra.mxu0 0.0
        %440 = vmatprep.subr.mxu0 0.0
        %441 = vmatpush1.msra.mxu0 0.0
        %442 = vmatprep.subr.mxu0 0.0
        %443 = vmatpush1.msra.mxu0 0.0
        %444 = vmatprep.subr.mxu0 0.0
        %445 = vmatpush1.msra.mxu0 0.0
        %446 = vmatprep.subr.mxu0 0.0
        %447 = vmatpush1.msra.mxu0 0.0
        %448 = vmatprep.subr.mxu0 0.0
        %449 = vmatpush1.msra.mxu0 0.0
        %450 = vmatprep.subr.mxu0 0.0
        %451 = vmatpush1.msra.mxu0 0.0
        %452 = vmatprep.subr.mxu0 0.0
        %453 = vmatpush1.msra.mxu0 0.0
        %454 = vmatprep.subr.mxu0 0.0
        %455 = vmatpush1.msra.mxu0 0.0
        %456 = vmatprep.subr.mxu0 0.0
        %457 = vmatpush1.msra.mxu0 0.0
        %458 = vmatprep.subr.mxu0 0.0
        %459 = vmatpush1.msra.mxu0 0.0
        %460 = vmatprep.subr.mxu0 0.0
        %461 = vmatpush1.msra.mxu0 0.0
        %462 = vmatprep.subr.mxu0 0.0
        %463 = vmatpush1.msra.mxu0 0.0
        %464 = vmatprep.subr.mxu0 0.0
        %465 = vmatpush1.msra.mxu0 0.0
        %466 = vmatprep.subr.mxu0 0.0
        %467 = vmatpush1.msra.mxu0 0.0
        %468 = vmatprep.subr.mxu0 0.0
        %469 = vmatpush1.msra.mxu0 0.0
        %470 = vmatprep.subr.mxu0 0.0
        %471 = vmatpush1.msra.mxu0 0.0
        %472 = vmatprep.mubr.f32.mxu0 0.0
        %473 = vmatmul.mubr.f32.gmra.mrb[0].mxu0 %v249
        %v474 = vpop.f32.mrb[0].mxu0
        %v475 = vadd.f32 %v240, %v474
        %v476 = vpop.f32.mrb[0].mxu0
        %v477 = vadd.f32 %v240, %v476
        %478 = vmatprep.mubr.f32.mxu0 0.0
        %479 = vmatmul.mubr.f32.gmra.mrb[0].mxu0 %v252
        %v480 = vpop.f32.mrb[0].mxu0
        %v481 = vadd.f32 %v245, %v480
        %v482 = vpop.f32.mrb[0].mxu0
        %v483 = vadd.f32 %v245, %v482
        %484 = vdwg.mxu0
        %485 = vmatprep.subr.mxu0 %v234
        %486 = vmatpush1.msra.mxu0 %v233
        %487 = vmatprep.subr.mxu0 0.0
        %488 = vmatpush1.msra.mxu0 0.0
        %489 = vmatprep.subr.mxu0 0.0
        %490 = vmatpush1.msra.mxu0 0.0
        %491 = vmatprep.subr.mxu0 0.0
        %492 = vmatpush1.msra.mxu0 0.0
        %493 = vmatprep.subr.mxu0 0.0
        %494 = vmatpush1.msra.mxu0 0.0
        %495 = vmatprep.subr.mxu0 0.0
        %496 = vmatpush1.msra.mxu0 0.0
        %497 = vmatprep.subr.mxu0 0.0
        %498 = vmatpush1.msra.mxu0 0.0
        %499 = vmatprep.subr.mxu0 0.0
        %500 = vmatpush1.msra.mxu0 0.0
        %501 = vmatprep.subr.mxu0 0.0
        %502 = vmatpush1.msra.mxu0 0.0
        %503 = vmatprep.subr.mxu0 0.0
        %504 = vmatpush1.msra.mxu0 0.0
        %505 = vmatprep.subr.mxu0 0.0
        %506 = vmatpush1.msra.mxu0 0.0
        %507 = vmatprep.subr.mxu0 0.0
        %508 = vmatpush1.msra.mxu0 0.0
        %509 = vmatprep.subr.mxu0 0.0
        %510 = vmatpush1.msra.mxu0 0.0
        %511 = vmatprep.subr.mxu0 0.0
        %512 = vmatpush1.msra.mxu0 0.0
        %513 = vmatprep.subr.mxu0 0.0
        %514 = vmatpush1.msra.mxu0 0.0
        %515 = vmatprep.subr.mxu0 0.0
        %516 = vmatpush1.msra.mxu0 0.0
        %517 = vmatprep.subr.mxu0 0.0
        %518 = vmatpush1.msra.mxu0 0.0
        %519 = vmatprep.subr.mxu0 0.0
        %520 = vmatpush1.msra.mxu0 0.0
        %521 = vmatprep.subr.mxu0 0.0
        %522 = vmatpush1.msra.mxu0 0.0
        %523 = vmatprep.subr.mxu0 0.0
        %524 = vmatpush1.msra.mxu0 0.0
        %525 = vmatprep.subr.mxu0 0.0
        %526 = vmatpush1.msra.mxu0 0.0
        %527 = vmatprep.subr.mxu0 0.0
        %528 = vmatpush1.msra.mxu0 0.0
        %529 = vmatprep.subr.mxu0 0.0
        %530 = vmatpush1.msra.mxu0 0.0
        %531 = vmatprep.subr.mxu0 0.0
        %532 = vmatpush1.msra.mxu0 0.0
        %533 = vmatprep.subr.mxu0 0.0
        %534 = vmatpush1.msra.mxu0 0.0
        %535 = vmatprep.subr.mxu0 0.0
        %536 = vmatpush1.msra.mxu0 0.0
        %537 = vmatprep.subr.mxu0 0.0
        %538 = vmatpush1.msra.mxu0 0.0
        %539 = vmatprep.subr.mxu0 0.0
        %540 = vmatpush1.msra.mxu0 0.0
        %541 = vmatprep.subr.mxu0 0.0
        %542 = vmatpush1.msra.mxu0 0.0
        %543 = vmatprep.subr.mxu0 0.0
        %544 = vmatpush1.msra.mxu0 0.0
        %545 = vmatprep.subr.mxu0 0.0
        %546 = vmatpush1.msra.mxu0 0.0
        %547 = vmatprep.subr.mxu0 0.0
        %548 = vmatpush1.msra.mxu0 0.0
        %549 = vmatprep.mubr.f32.mxu0 0.0
        %550 = vmatmul.mubr.f32.gmra.mrb[0].mxu0 %v249
        %v551 = vpop.f32.mrb[0].mxu0
        %v552 = vadd.f32 %v240, %v551
        %v553 = vpop.f32.mrb[0].mxu0
        %v554 = vadd.f32 %v240, %v553
        %555 = vmatprep.mubr.f32.mxu0 0.0
        %556 = vmatmul.mubr.f32.gmra.mrb[0].mxu0 %v252
        %v557 = vpop.f32.mrb[0].mxu0
        %v558 = vadd.f32 %v245, %v557
        %v559 = vpop.f32.mrb[0].mxu0
        %v560 = vadd.f32 %v245, %v559
        %561 = vdwg.mxu0
        %v562 = vmax.f32 %v321, 0.0
        %v563 = vmax.f32 %v323, 0.0
        %v564 = vmax.f32 %v398, 0.0
        %v565 = vmax.f32 %v400, 0.0
        %v566 = vmax.f32 %v475, 0.0
        %v567 = vmax.f32 %v477, 0.0
        %v568 = vmax.f32 %v552, 0.0
        %v569 = vmax.f32 %v554, 0.0
        %v570 = vmax.f32 %v327, 0.0
        %v571 = vmax.f32 %v329, 0.0
        %v572 = vmax.f32 %v404, 0.0
        %v573 = vmax.f32 %v406, 0.0
        %v574 = vmax.f32 %v481, 0.0
        %v575 = vmax.f32 %v483, 0.0
        %v576 = vmax.f32 %v558, 0.0
        %v577 = vmax.f32 %v560, 0.0
        %578 = vst [vmem:[%s223] sm:$0xff] %v562
        %579 = vst [vmem:[%s223 + $0x8] sm:$0xff] %v563
        %580 = vst [vmem:[%s223 + $0x10] sm:$0xff] %v564
        %581 = vst [vmem:[%s223 + $0x18] sm:$0xff] %v565
        %582 = vst [vmem:[%s223 + $0x20] sm:$0xff] %v566
        %583 = vst [vmem:[%s223 + $0x28] sm:$0xff] %v567
        %584 = vst [vmem:[%s223 + $0x30] sm:$0xff] %v568
        %585 = vst [vmem:[%s223 + $0x38] sm:$0xff] %v569
        %586 = vst [vmem:[%s223 + $0x40] sm:$0xff] %v570
        %587 = vst [vmem:[%s223 + $0x48] sm:$0xff] %v571
        %588 = vst [vmem:[%s223 + $0x50] sm:$0xff] %v572
        %589 = vst [vmem:[%s223 + $0x58] sm:$0xff] %v573
        %590 = vst [vmem:[%s223 + $0x60] sm:$0xff] %v574
        %591 = vst [vmem:[%s223 + $0x68] sm:$0xff] %v575
        %592 = vst [vmem:[%s223 + $0x70] sm:$0xff] %v576
        %593 = vst [vmem:[%s223 + $0x78] sm:$0xff] %v577
        %s594 = smul.u32 8, %s20
        %p595 = scmp.lt.s32.totalorder %s19, 1
        %s596 = scalar_select %p595, %s19, 1
        %p597 = scmp.lt.s32.totalorder %s594, 7
        %s598 = scalar_select %p597, %s594, 7
        %s599 = smul.addr %s596, 16
        %s600 = sadd.s32 %s598, %s599
        %s601 = smul.addr %s600, 8
        %s602 = scalar_lea.vmem %s3, %s601
        // Predicated region
        $region37: #{upscale_neck.3} parent=31 // pred_check
          %p603 = pneg %p117
        $region38: #{upscale_neck.3} parent=31 // pred_check_branch
          %605 = sbr.rel (%p603) target = $region40
        $region39: #{upscale_neck.3} parent=31 // pred_region
          %s606 = smul.u32 8, %s20
        $region40: #{upscale_neck.3} parent=31 // pred_fallthru
          _
      $region32: #{upscale_neck.3} parent=5 // pred_fallthru
        _
      %p607 = scmp.le.s32.totalorder 2, %s10
      // Predicated region
      $region41: #{upscale_neck.3} parent=5 // pred_check
        %p608 = pneg %p607
      $region42: #{upscale_neck.3} parent=5 // pred_check_branch
        %610 = sbr.rel (%p608) target = $region44
      $region43: #{upscale_neck.3} parent=5 // pred_region
        %s611 = ssub.s32 %s10, 2
        // Predicated region
        $region45: #{upscale_neck.3} parent=43 // pred_check
          %p612 = pneg %p123
        $region46: #{upscale_neck.3} parent=43 // pred_check_branch
          %614 = sbr.rel (%p612) target = $region48
        $region47: #{upscale_neck.3} parent=43 // pred_region
          %s615 = smul.u32 8, %s22
          %p616 = scmp.lt.s32.totalorder %s21, 1
          %s617 = scalar_select %p616, %s21, 1
          %p618 = scmp.lt.s32.totalorder %s615, 7
          %s619 = scalar_select %p618, %s615, 7
          %s620 = smul.addr %s617, 16
          %s621 = sadd.s32 %s619, %s620
          %s622 = smul.addr %s621, 8
          %s623 = scalar_lea.vmem %s3, %s622
        $region48: #{upscale_neck.3} parent=43 // pred_fallthru
          _
      $region44: #{upscale_neck.3} parent=5 // pred_fallthru
        _
    $region6: #{upscale_neck.3} parent=1 // loop_footer
      %s14 = sadd.s32 1, %s10
    $region7: #{upscale_neck.3} parent=1 // loop_footer_branch
      %9 = sbr.rel target = $region3
    $region8: #{upscale_neck.3} parent=1 // loop_exit
      _
    %624 = vsyncpa [#allocation3], 1
    %s625 = scalar_lea.sflag [#allocation3], 1
    %626 = vsyncpa %s625, 1

// kernel: upscale_neck.2
$region0: #{upscale_neck.2}
  #allocation0 [shape = 'u32[]', space=smem, size = 0x4, offset = 0x4, fixed_abs, tag = 'smem constant byte address 0x4 - core index']
  #allocation1 [shape = 'u32[144,128]{1,0:T(1,128)}', space=vmem, size = 0x12000, scoped, tag = 'internal scratch']
  %s0 = inlined_call_operand.vmem [shape: f32[2,4,256], index: 0, kind: input, shape index: {}]
  %s1 = inlined_call_operand.vmem [shape: f32[32,4], index: 1, kind: input, shape index: {}]
  %s2 = inlined_call_operand.vmem [shape: f32[32,1], index: 2, kind: input, shape index: {}]
  %s3 = inlined_call_operand.vmem [shape: f32[2,32,256], index: 3, kind: output, shape index: {}]
  %s4 = sld [smem:[#allocation0]]
  $region45: #{upscale_neck.2} parent=0
    _
  %s6 = ssub.s32 1, %s4
  %s7 = scalar_select 0, %s6, %s4
  loop: start=0, step=1, limit=4
  $region2: #{upscale_neck.2} parent=0 // loop_pre_header
    _
  $region3: #{upscale_neck.2} parent=0 // loop_header
    %s9 = sphi 0, %s13
    %p10 = scmp.ge.s32.totalorder %s9, 4
    %s16 = sphi 0, %s28
    %s17 = sphi 0, %s24
    %s18 = sphi 0, %s16
    %s19 = sphi 0, %s17
    %s20 = sphi 0, %s18
    %s21 = sphi 0, %s19
    %s33 = sphi 0, %s35
    %s36 = sphi 0, %s33
    %s37 = sphi 0, %s36
    %s53 = sphi 0, %s37
    %s57 = sphi 0, %s57
    %s59 = sphi 0, %s57
    %s60 = sphi 0, %s59
    %s74 = sphi 0, %s60
    %s78 = sphi 0, %s78
    %s80 = sphi 0, %s78
    %s81 = sphi 0, %s80
    %s95 = sphi 0, %s81
    %s103 = sphi 0, %s105
    %s106 = sphi 0, %s103
    %s107 = sphi 0, %s106
    %s123 = sphi 0, %s107
  $region4: #{upscale_neck.2} parent=0 // loop_header_branch
    %12 = sbr.rel (%p10) target = $region8
  $region5: #{upscale_neck.2} parent=0 // loop_body
    %s14 = ssub.s32 %s9, 1
    %s15 = ssub.s32 %s9, 2
    %s22 = sadd.s32 1, %s17
    %p23 = scmp.ge.s32.totalorder %s22, 1
    %s24 = scalar_select %p23, 0, %s22
    %s25 = sadd.s32 1, %s16
    %s26 = scalar_select %p23, %s25, %s16
    %p27 = scmp.ge.s32.totalorder %s26, 2
    %s28 = scalar_select %p27, 0, %s26
    %s29 = ssub.s32 %s16, %s28
    %s30 = ssub.s32 %s17, %s24
    %s31 = sor.u32 %s29, %s30
    %p32 = scmp.eq.s32.totalorder %s31, 0
    %s34 = sadd.s32 %s33, 1
    %s35 = scalar_select %p32, %s33, %s34
    %p38 = pneg %p32
    %p39 = scmp.eq.s32.totalorder %s9, 1
    %p40 = por %p38, %p39
    %p41 = scmp.ne.s32.totalorder %s33, %s36
    %p42 = scmp.eq.s32.totalorder %s9, 0
    %p43 = por %p41, %p42
    %p44 = scmp.ne.s32.totalorder %s33, %s36
    %p45 = scmp.eq.s32.totalorder %s14, 1
    %p46 = por %p44, %p45
    %p47 = scmp.ne.s32.totalorder %s36, %s37
    %p48 = scmp.eq.s32.totalorder %s14, 0
    %p49 = por %p47, %p48
    %p50 = scmp.ne.s32.totalorder %s36, %s37
    %p51 = scmp.eq.s32.totalorder %s15, 1
    %p52 = por %p50, %p51
    %p54 = scmp.ne.s32.totalorder %s37, %s53
    %p55 = scmp.eq.s32.totalorder %s15, 0
    %p56 = por %p54, %p55
    %s58 = sadd.s32 %s57, 1
    %p61 = scmp.eq.s32.totalorder %s9, 1
    %p62 = scmp.ne.s32.totalorder %s57, %s59
    %p63 = scmp.eq.s32.totalorder %s9, 0
    %p64 = por %p62, %p63
    %p65 = scmp.ne.s32.totalorder %s57, %s59
    %p66 = scmp.eq.s32.totalorder %s14, 1
    %p67 = por %p65, %p66
    %p68 = scmp.ne.s32.totalorder %s59, %s60
    %p69 = scmp.eq.s32.totalorder %s14, 0
    %p70 = por %p68, %p69
    %p71 = scmp.ne.s32.totalorder %s59, %s60
    %p72 = scmp.eq.s32.totalorder %s15, 1
    %p73 = por %p71, %p72
    %p75 = scmp.ne.s32.totalorder %s60, %s74
    %p76 = scmp.eq.s32.totalorder %s15, 0
    %p77 = por %p75, %p76
    %s79 = sadd.s32 %s78, 1
    %p82 = scmp.eq.s32.totalorder %s9, 1
    %p83 = scmp.ne.s32.totalorder %s78, %s80
    %p84 = scmp.eq.s32.totalorder %s9, 0
    %p85 = por %p83, %p84
    %p86 = scmp.ne.s32.totalorder %s78, %s80
    %p87 = scmp.eq.s32.totalorder %s14, 1
    %p88 = por %p86, %p87
    %p89 = scmp.ne.s32.totalorder %s80, %s81
    %p90 = scmp.eq.s32.totalorder %s14, 0
    %p91 = por %p89, %p90
    %p92 = scmp.ne.s32.totalorder %s80, %s81
    %p93 = scmp.eq.s32.totalorder %s15, 1
    %p94 = por %p92, %p93
    %p96 = scmp.ne.s32.totalorder %s81, %s95
    %p97 = scmp.eq.s32.totalorder %s15, 0
    %p98 = por %p96, %p97
    %s99 = ssub.s32 %s16, %s28
    %s100 = ssub.s32 %s17, %s24
    %s101 = sor.u32 %s99, %s100
    %p102 = scmp.eq.s32.totalorder %s101, 0
    %s104 = sadd.s32 %s103, 1
    %s105 = scalar_select %p102, %s103, %s104
    %p108 = pneg %p102
    %p109 = scmp.eq.s32.totalorder %s9, 1
    %p110 = por %p108, %p109
    %p111 = scmp.ne.s32.totalorder %s103, %s106
    %p112 = scmp.eq.s32.totalorder %s9, 0
    %p113 = por %p111, %p112
    %p114 = scmp.ne.s32.totalorder %s103, %s106
    %p115 = scmp.eq.s32.totalorder %s14, 1
    %p116 = por %p114, %p115
    %p117 = scmp.ne.s32.totalorder %s106, %s107
    %p118 = scmp.eq.s32.totalorder %s14, 0
    %p119 = por %p117, %p118
    %p120 = scmp.ne.s32.totalorder %s106, %s107
    %p121 = scmp.eq.s32.totalorder %s15, 1
    %p122 = por %p120, %p121
    %p124 = scmp.ne.s32.totalorder %s107, %s123
    %p125 = scmp.eq.s32.totalorder %s15, 0
    %p126 = por %p124, %p125
    %p127 = scmp.le.s32.totalorder 1, %s9
    %p128 = scmp.lt.s32.totalorder %s9, 3
    %p129 = pnand %p127, %p128
    %p130 = pneg %p129
    // Predicated region
    $region9: #{upscale_neck.2} parent=5 // pred_check
      _
    $region10: #{upscale_neck.2} parent=5 // pred_check_branch
      %132 = sbr.rel (%p129) target = $region12
    $region11: #{upscale_neck.2} parent=5 // pred_region
      %s133 = ssub.s32 %s9, 1
      // Predicated region
      $region13: #{upscale_neck.2} parent=11 // pred_check
        %p134 = pneg %p70
      $region14: #{upscale_neck.2} parent=11 // pred_check_branch
        %136 = sbr.rel (%p134) target = $region16
      $region15: #{upscale_neck.2} parent=11 // pred_region
        _
      $region16: #{upscale_neck.2} parent=11 // pred_fallthru
        _
      // Predicated region
      $region17: #{upscale_neck.2} parent=11 // pred_check
        %p137 = pneg %p91
      $region18: #{upscale_neck.2} parent=11 // pred_check_branch
        %139 = sbr.rel (%p137) target = $region20
      $region19: #{upscale_neck.2} parent=11 // pred_region
        _
      $region20: #{upscale_neck.2} parent=11 // pred_fallthru
        _
    $region12: #{upscale_neck.2} parent=5 // pred_fallthru
      _
    %p140 = scmp.lt.s32.totalorder %s9, 2
    // Predicated region
    $region21: #{upscale_neck.2} parent=5 // pred_check
      %p141 = pneg %p140
    $region22: #{upscale_neck.2} parent=5 // pred_check_branch
      %143 = sbr.rel (%p141) target = $region24
    $region23: #{upscale_neck.2} parent=5 // pred_region
      // Predicated region
      $region25: #{upscale_neck.2} parent=23 // pred_check
        %p144 = pneg %p43
      $region26: #{upscale_neck.2} parent=23 // pred_check_branch
        %146 = sbr.rel (%p144) target = $region28
      $region27: #{upscale_neck.2} parent=23 // pred_region
        %s147 = smul.u32 2, %s17
        %p148 = scmp.lt.s32.totalorder %s16, 1
        %s149 = scalar_select %p148, %s16, 1
        %p150 = scmp.lt.s32.totalorder %s147, 1
        %s151 = scalar_select %p150, %s147, 1
        %s152 = smul.addr %s149, 2
        %s153 = sadd.s32 %s151, %s152
        %s154 = smul.addr %s153, 4
        %s155 = scalar_lea.vmem %s0, %s154
        %s156 = smul.u32 2, %s17
      $region28: #{upscale_neck.2} parent=23 // pred_fallthru
        _
    $region24: #{upscale_neck.2} parent=5 // pred_fallthru
      _
    %p157 = scmp.le.s32.totalorder 1, %s9
    %p158 = scmp.lt.s32.totalorder %s9, 3
    %p159 = pnand %p157, %p158
    %p160 = pneg %p159
    // Predicated region
    $region29: #{upscale_neck.2} parent=5 // pred_check
      _
    $region30: #{upscale_neck.2} parent=5 // pred_check_branch
      %162 = sbr.rel (%p159) target = $region32
    $region31: #{upscale_neck.2} parent=5 // pred_region
      %s163 = ssub.s32 %s9, 1
      %s164 = smul.u32 2, %s19
      %p165 = scmp.lt.s32.totalorder %s18, 1
      %s166 = scalar_select %p165, %s18, 1
      %p167 = scmp.lt.s32.totalorder %s164, 1
      %s168 = scalar_select %p167, %s164, 1
      %s169 = smul.addr %s166, 2
      %s170 = sadd.s32 %s168, %s169
      %s171 = smul.addr %s170, 4
      %s172 = scalar_lea.vmem %s0, %s171
      %p173 = pneg %p49
      %p174 = pneg %p46
      %p175 = pneg %p70
      %p176 = pneg %p67
      %p177 = pneg %p91
      %p178 = pneg %p88
      %p179 = pneg %p119
      %p180 = pneg %p116
      %s181 = smul.u32 2, %s19
      %p182 = scmp.lt.s32.totalorder %s18, 1
      %s183 = scalar_select %p182, %s18, 1
      %p184 = scmp.lt.s32.totalorder %s181, 1
      %s185 = scalar_select %p184, %s181, 1
      %s186 = smul.addr %s183, 8
      %s187 = sadd.s32 %s185, %s186
      %s188 = smul.addr %s187, 8
      %s189 = scalar_lea.vmem %s3, %s188
      %s190 = smul.u32 2, %s19
      %p191 = scmp.lt.s32.totalorder %s18, 1
      %s192 = scalar_select %p191, %s18, 1
      %p193 = scmp.lt.s32.totalorder %s190, 1
      %s194 = scalar_select %p193, %s190, 1
      %s195 = smul.addr %s192, 2
      %s196 = sadd.s32 %s194, %s195
      %s197 = smul.addr %s196, 4
      %s198 = scalar_lea.vmem %s0, %s197
      %s199 = smul.u32 2, %s19
      %s200 = smul.u32 2, %s19
      %p201 = scmp.lt.s32.totalorder %s18, 1
      %s202 = scalar_select %p201, %s18, 1
      %p203 = scmp.lt.s32.totalorder %s200, 1
      %s204 = scalar_select %p203, %s200, 1
      %s205 = smul.addr %s202, 8
      %s206 = sadd.s32 %s204, %s205
      %s207 = smul.addr %s206, 8
      %s208 = scalar_lea.vmem %s3, %s207
      %s209 = smul.u32 2, %s19
      %v210 = vld [vmem:[%s1] sm:$0xff]
      %v211 = vld [vmem:[%s1 + $0x8] sm:$0xff]
      %v212 = vld [vmem:[%s1 + $0x10] sm:$0xff]
      %v213 = vld [vmem:[%s1 + $0x18] sm:$0xff]
      %v214 = vld [vmem:[%s198] sm:$0xff]
      %v215 = vld [vmem:[%s2] sm:$0xff]
      %v216 = vld [vmem:[%s2 + $0x8] sm:$0xff]
      %v217 = vld [vmem:[%s2 + $0x10] sm:$0xff]
      %v218 = vld [vmem:[%s2 + $0x18] sm:$0xff]
      %220 = vset.pattern.permute.xlu0 0
      %221 = vperm.xlu0 %220, %v215
      %v222 = vpop.permute.xlu0 %221
      %225 = vset.pattern.permute.xlu0 0
      %226 = vperm.xlu0 %225, %v216
      %v227 = vpop.permute.xlu0 %226
      %230 = vset.pattern.permute.xlu0 0
      %231 = vperm.xlu0 %230, %v217
      %v232 = vpop.permute.xlu0 %231
      %235 = vset.pattern.permute.xlu0 0
      %236 = vperm.xlu0 %235, %v218
      %v237 = vpop.permute.xlu0 %236
      %v240 = vcombine.high %v214, %v214
      %vm241 = vcmask 31744
      %v243 = vsel %vm241, %v210, 0
      %v246 = vsel %vm241, %v211, 0
      %v249 = vsel %vm241, %v212, 0
      %v252 = vsel %vm241, %v213, 0
      %vm254 = vcmask 1043456
      %v255 = vsel %vm254, %v214, 0
      %v257 = vsel %vm254, %v240, 0
      %259 = vmatprep.subr.mxu0 %v257
      %260 = vmatpush1.msra.mxu0 %v255
      %261 = vmatprep.subr.mxu0 0.0
      %262 = vmatpush1.msra.mxu0 0.0
      %263 = vmatprep.subr.mxu0 0.0
      %264 = vmatpush1.msra.mxu0 0.0
      %265 = vmatprep.subr.mxu0 0.0
      %266 = vmatpush1.msra.mxu0 0.0
      %267 = vmatprep.subr.mxu0 0.0
      %268 = vmatpush1.msra.mxu0 0.0
      %269 = vmatprep.subr.mxu0 0.0
      %270 = vmatpush1.msra.mxu0 0.0
      %271 = vmatprep.subr.mxu0 0.0
      %272 = vmatpush1.msra.mxu0 0.0
      %273 = vmatprep.subr.mxu0 0.0
      %274 = vmatpush1.msra.mxu0 0.0
      %275 = vmatprep.subr.mxu0 0.0
      %276 = vmatpush1.msra.mxu0 0.0
      %277 = vmatprep.subr.mxu0 0.0
      %278 = vmatpush1.msra.mxu0 0.0
      %279 = vmatprep.subr.mxu0 0.0
      %280 = vmatpush1.msra.mxu0 0.0
      %281 = vmatprep.subr.mxu0 0.0
      %282 = vmatpush1.msra.mxu0 0.0
      %283 = vmatprep.subr.mxu0 0.0
      %284 = vmatpush1.msra.mxu0 0.0
      %285 = vmatprep.subr.mxu0 0.0
      %286 = vmatpush1.msra.mxu0 0.0
      %287 = vmatprep.subr.mxu0 0.0
      %288 = vmatpush1.msra.mxu0 0.0
      %289 = vmatprep.subr.mxu0 0.0
      %290 = vmatpush1.msra.mxu0 0.0
      %291 = vmatprep.subr.mxu0 0.0
      %292 = vmatpush1.msra.mxu0 0.0
      %293 = vmatprep.subr.mxu0 0.0
      %294 = vmatpush1.msra.mxu0 0.0
      %295 = vmatprep.subr.mxu0 0.0
      %296 = vmatpush1.msra.mxu0 0.0
      %297 = vmatprep.subr.mxu0 0.0
      %298 = vmatpush1.msra.mxu0 0.0
      %299 = vmatprep.subr.mxu0 0.0
      %300 = vmatpush1.msra.mxu0 0.0
      %301 = vmatprep.subr.mxu0 0.0
      %302 = vmatpush1.msra.mxu0 0.0
      %303 = vmatprep.subr.mxu0 0.0
      %304 = vmatpush1.msra.mxu0 0.0
      %305 = vmatprep.subr.mxu0 0.0
      %306 = vmatpush1.msra.mxu0 0.0
      %307 = vmatprep.subr.mxu0 0.0
      %308 = vmatpush1.msra.mxu0 0.0
      %309 = vmatprep.subr.mxu0 0.0
      %310 = vmatpush1.msra.mxu0 0.0
      %311 = vmatprep.subr.mxu0 0.0
      %312 = vmatpush1.msra.mxu0 0.0
      %313 = vmatprep.subr.mxu0 0.0
      %314 = vmatpush1.msra.mxu0 0.0
      %315 = vmatprep.subr.mxu0 0.0
      %316 = vmatpush1.msra.mxu0 0.0
      %317 = vmatprep.subr.mxu0 0.0
      %318 = vmatpush1.msra.mxu0 0.0
      %319 = vmatprep.subr.mxu0 0.0
      %320 = vmatpush1.msra.mxu0 0.0
      %321 = vmatprep.subr.mxu0 0.0
      %322 = vmatpush1.msra.mxu0 0.0
      %323 = vmatprep.mubr.f32.mxu0 0.0
      %324 = vmatmul.mubr.f32.gmra.mrb[0].mxu0 %v243
      %v325 = vpop.f32.mrb[0].mxu0
      %v326 = vadd.f32 %v222, %v325
      %v327 = vpop.f32.mrb[0].mxu0
      %v328 = vadd.f32 %v222, %v327
      %329 = vmatprep.mubr.f32.mxu0 0.0
      %330 = vmatmul.mubr.f32.gmra.mrb[0].mxu0 %v246
      %v331 = vpop.f32.mrb[0].mxu0
      %v332 = vadd.f32 %v227, %v331
      %v333 = vpop.f32.mrb[0].mxu0
      %v334 = vadd.f32 %v227, %v333
      %335 = vmatprep.mubr.f32.mxu0 0.0
      %336 = vmatmul.mubr.f32.gmra.mrb[0].mxu0 %v249
      %v337 = vpop.f32.mrb[0].mxu0
      %v338 = vadd.f32 %v232, %v337
      %v339 = vpop.f32.mrb[0].mxu0
      %v340 = vadd.f32 %v232, %v339
      %341 = vmatprep.mubr.f32.mxu0 0.0
      %342 = vmatmul.mubr.f32.gmra.mrb[0].mxu0 %v252
      %v343 = vpop.f32.mrb[0].mxu0
      %v344 = vadd.f32 %v237, %v343
      %v345 = vpop.f32.mrb[0].mxu0
      %v346 = vadd.f32 %v237, %v345
      %347 = vdwg.mxu0
      %v348 = vmax.f32 %v326, 0.0
      %v349 = vmax.f32 %v328, 0.0
      %v350 = vmax.f32 %v332, 0.0
      %v351 = vmax.f32 %v334, 0.0
      %v352 = vmax.f32 %v338, 0.0
      %v353 = vmax.f32 %v340, 0.0
      %v354 = vmax.f32 %v344, 0.0
      %v355 = vmax.f32 %v346, 0.0
      %356 = vst [vmem:[%s208] sm:$0xff] %v348
      %357 = vst [vmem:[%s208 + $0x8] sm:$0xff] %v349
      %358 = vst [vmem:[%s208 + $0x10] sm:$0xff] %v350
      %359 = vst [vmem:[%s208 + $0x18] sm:$0xff] %v351
      %360 = vst [vmem:[%s208 + $0x20] sm:$0xff] %v352
      %361 = vst [vmem:[%s208 + $0x28] sm:$0xff] %v353
      %362 = vst [vmem:[%s208 + $0x30] sm:$0xff] %v354
      %363 = vst [vmem:[%s208 + $0x38] sm:$0xff] %v355
      %s364 = smul.u32 2, %s19
      %p365 = scmp.lt.s32.totalorder %s18, 1
      %s366 = scalar_select %p365, %s18, 1
      %p367 = scmp.lt.s32.totalorder %s364, 1
      %s368 = scalar_select %p367, %s364, 1
      %s369 = smul.addr %s366, 8
      %s370 = sadd.s32 %s368, %s369
      %s371 = smul.addr %s370, 8
      %s372 = scalar_lea.vmem %s3, %s371
      // Predicated region
      $region33: #{upscale_neck.2} parent=31 // pred_check
        %p373 = pneg %p116
      $region34: #{upscale_neck.2} parent=31 // pred_check_branch
        %375 = sbr.rel (%p373) target = $region36
      $region35: #{upscale_neck.2} parent=31 // pred_region
        %s376 = smul.u32 2, %s19
      $region36: #{upscale_neck.2} parent=31 // pred_fallthru
        _
    $region32: #{upscale_neck.2} parent=5 // pred_fallthru
      _
    %p377 = scmp.le.s32.totalorder 2, %s9
    // Predicated region
    $region37: #{upscale_neck.2} parent=5 // pred_check
      %p378 = pneg %p377
    $region38: #{upscale_neck.2} parent=5 // pred_check_branch
      %380 = sbr.rel (%p378) target = $region40
    $region39: #{upscale_neck.2} parent=5 // pred_region
      %s381 = ssub.s32 %s9, 2
      // Predicated region
      $region41: #{upscale_neck.2} parent=39 // pred_check
        %p382 = pneg %p122
      $region42: #{upscale_neck.2} parent=39 // pred_check_branch
        %384 = sbr.rel (%p382) target = $region44
      $region43: #{upscale_neck.2} parent=39 // pred_region
        %s385 = smul.u32 2, %s21
        %p386 = scmp.lt.s32.totalorder %s20, 1
        %s387 = scalar_select %p386, %s20, 1
        %p388 = scmp.lt.s32.totalorder %s385, 1
        %s389 = scalar_select %p388, %s385, 1
        %s390 = smul.addr %s387, 8
        %s391 = sadd.s32 %s389, %s390
        %s392 = smul.addr %s391, 8
        %s393 = scalar_lea.vmem %s3, %s392
      $region44: #{upscale_neck.2} parent=39 // pred_fallthru
        _
    $region40: #{upscale_neck.2} parent=5 // pred_fallthru
      _
  $region6: #{upscale_neck.2} parent=0 // loop_footer
    %s13 = sadd.s32 1, %s9
  $region7: #{upscale_neck.2} parent=0 // loop_footer_branch
    %8 = sbr.rel target = $region3
  $region8: #{upscale_neck.2} parent=0 // loop_exit
    _

</llo_original>
